<compile_context>
chip_gen: v7x
topology: tpu7x:2x2x1
jax: 0.10.0
libtpu: 0.0.40
codegen_flags: <defaults>
</compile_context>

<pallas_src>
import jax
import jax.numpy as jnp
from jax.experimental import pallas as pl
from jax.experimental.pallas import tpu as pltpu

_LANE = 128


def _custom_act_kernel(x_ref, o_ref):
    x = x_ref[...]
    # sigmoid(x) - 0.5, computed in the input dtype (0.5 is exact in bf16/f32).
    o_ref[...] = (jax.nn.sigmoid(x) - jnp.asarray(0.5, x.dtype)).astype(o_ref.dtype)


def custom_act(x, *, block_rows=2048):
    """Pallas TPU implementation of CustomAct.forward: sigmoid(x) - 0.5."""
    orig_shape = x.shape
    dtype = x.dtype
    n = x.size

    # Flatten to a lane-dense 2-D slab: last dim = 128 lanes, rows = sublanes.
    rows = pl.cdiv(n, _LANE)
    rows_aligned = ((rows + 7) // 8) * 8          # sublane multiple of 8
    tile_rows = max(8, min(((block_rows + 7) // 8) * 8, rows_aligned))
    rows_padded = ((rows_aligned + tile_rows - 1) // tile_rows) * tile_rows
    total_padded = rows_padded * _LANE

    x_flat = x.reshape(-1)
    if total_padded != n:
        x_flat = jnp.pad(x_flat, (0, total_padded - n))
    x2 = x_flat.reshape(rows_padded, _LANE)

    grid = (rows_padded // tile_rows,)

    out2 = pl.pallas_call(
        _custom_act_kernel,
        out_shape=jax.ShapeDtypeStruct((rows_padded, _LANE), dtype),
        grid=grid,
        in_specs=[pl.BlockSpec((tile_rows, _LANE), lambda i: (i, 0))],
        out_specs=pl.BlockSpec((tile_rows, _LANE), lambda i: (i, 0)),
        compiler_params=pltpu.CompilerParams(
            dimension_semantics=("parallel",),
        ),
    )(x2)

    return out2.reshape(-1)[:n].reshape(orig_shape)


def custom_act_ref(x):
    """Pure-JAX reference mirroring the PyTorch forward exactly."""
    return jax.nn.sigmoid(x) - 0.5


if __name__ == "__main__":
    B, C, H, W = 2, 4, 16, 16
    key = jax.random.PRNGKey(0)
    x = jax.random.normal(key, (B, C, H, W), dtype=jnp.float32)

    out = custom_act(x)
    out = jax.block_until_ready(out)

    ref = custom_act_ref(x)
    assert out.shape == x.shape, out.shape
    assert out.dtype == x.dtype, out.dtype
    assert jnp.allclose(out, ref, atol=1e-6, rtol=1e-6), "Pallas CustomAct mismatch vs reference"

    # Also exercise a non-multiple-of-(8*128) size and a bf16 input.
    x_odd = jax.random.normal(jax.random.PRNGKey(1), (3, 5, 7), dtype=jnp.bfloat16)
    out_odd = jax.block_until_ready(custom_act(x_odd))
    ref_odd = custom_act_ref(x_odd)
    assert out_odd.shape == x_odd.shape and out_odd.dtype == x_odd.dtype
    assert jnp.allclose(out_odd.astype(jnp.float32), ref_odd.astype(jnp.float32),
                        atol=1e-2, rtol=1e-2), "Pallas CustomAct bf16 mismatch vs reference"

    print("KERNEL_OK")
</pallas_src>

<mosaic_0001>
module attributes {stable_mosaic.version = 11 : i64} {
  func.func @_custom_act_kernel(%arg0: i32, %arg1: memref<16x128xf32, #tpu.memory_space<vmem>>, %arg2: memref<16x128xf32, #tpu.memory_space<vmem>>) attributes {dimension_semantics = [#tpu.dimension_semantics<parallel>], iteration_bounds = array<i64: 1>, scalar_prefetch = 0 : i64, scratch_operands = 0 : i64, tpu.core_type = #tpu.core_type<tc>, window_params = [{transform_indices = @transform_0, window_bounds = array<i64: 16, 128>}, {transform_indices = @transform_1, window_bounds = array<i64: 16, 128>}]} {
    %c0 = arith.constant 0 : index
    %c0_0 = arith.constant 0 : index
    %0 = vector.load %arg1[%c0, %c0_0] : memref<16x128xf32, #tpu.memory_space<vmem>>, vector<16x128xf32>
    %1 = arith.negf %0 : vector<16x128xf32>
    %2 = math.exp %1 : vector<16x128xf32>
    %cst = arith.constant 1.000000e+00 : f32
    %3 = vector.broadcast %cst : f32 to vector<16x128xf32>
    %4 = arith.addf %3, %2 : vector<16x128xf32>
    %5 = arith.divf %3, %4 : vector<16x128xf32>
    %cst_1 = arith.constant 5.000000e-01 : f32
    %6 = vector.broadcast %cst_1 : f32 to vector<16x128xf32>
    %7 = arith.subf %5, %6 : vector<16x128xf32>
    %c0_2 = arith.constant 0 : index
    %c0_3 = arith.constant 0 : index
    %8 = vector.load %arg2[%c0_2, %c0_3] : memref<16x128xf32, #tpu.memory_space<vmem>>, vector<16x128xf32>
    tpu.vector_store %arg2[%c0_2, %c0_3], %7 {strides = array<i32>} : memref<16x128xf32, #tpu.memory_space<vmem>>, vector<16x128xf32>,
    return
  }
  func.func @transform_0(%arg0: i32) -> (i32, i32) {
    %c0_i32 = arith.constant 0 : i32
    %c0_i32_0 = arith.constant 0 : i32
    return %arg0, %c0_i32 : i32, i32
  }
  func.func @transform_1(%arg0: i32) -> (i32, i32) {
    %c0_i32 = arith.constant 0 : i32
    %c0_i32_0 = arith.constant 0 : i32
    return %arg0, %c0_i32 : i32, i32
  }
}

</mosaic_0001>

<llo_original>
// kernel: tpu_custom_call.1
$region0: #{tpu_custom_call.1}
  #allocation0 [shape = 'u32[]', space=smem, size = 0x4, offset = 0x4, fixed_abs, tag = 'smem constant byte address 0x4 - core index']
  #allocation1 [shape = 'u32[144,128]{1,0:T(1,128)}', space=vmem, size = 0x12000, scoped, tag = 'internal scratch']
  %s0 = inlined_call_operand.hbm [shape: f32[16,128], index: 0, kind: input, shape index: {}]
  %s1 = inlined_call_operand.hbm [shape: f32[16,128], index: 1, kind: output, shape index: {}]
  %s2 = sld [smem:[#allocation0]]
  $region18: #{tpu_custom_call.1} parent=0
    _
  %s4 = ssub.s32 1, %s2
  %s5 = scalar_select 0, %s4, %s2
  $region1: #{tpu_custom_call.1} parent=0
    #allocation2 [shape = 'u8[8192]{0}', space=vmem, size = 0x2000, scoped, tag = 'input window, operand 0, single buffered']
    #allocation3 [shape = 's32[1]{0}', space=sflag, size = 0x4, scoped, tag = 'scoped memory for tpu_custom_call.1']
    #allocation4 [shape = 's32[1]{0}', space=sflag, size = 0x4, scoped, tag = 'scoped memory for tpu_custom_call.1']
    #allocation5 [shape = 'u8[8192]{0}', space=vmem, size = 0x2000, scoped, tag = 'output window, operand 0, single buffered']
    %6 = vsyncpa [#allocation3], 0
    %7 = vsyncpa [#allocation4], 0
    // Predicated region
    $region2: #{tpu_custom_call.1} parent=1 // pred_check
      _
    $region3: #{tpu_custom_call.1} parent=1 // pred_check_branch
      %9 = sbr.rel (0) target = $region5
    $region4: #{tpu_custom_call.1} parent=1 // pred_region
      %s11 = ssub.s32 256, 256
      %12 = vsyncadd [#allocation3], %s11
      %s13 = sshll.u32 [#allocation2], 4
      %s14 = int_to_ptr.vmem [resolvable:$true] %s13
      %19 = dma.hbm_to_vmem [thread:$0]  %s0, 256, %s14, [#allocation3], 128, 128, 8
    $region5: #{tpu_custom_call.1} parent=1 // pred_fallthru
      _
    // Predicated region
    $region6: #{tpu_custom_call.1} parent=1 // pred_check
      _
    $region7: #{tpu_custom_call.1} parent=1 // pred_check_branch
      %21 = sbr.rel (0) target = $region9
    $region8: #{tpu_custom_call.1} parent=1 // pred_region
      %22 = dma.done [#allocation3], 256
    $region9: #{tpu_custom_call.1} parent=1 // pred_fallthru
      _
    %v23 = vld [vmem:[#allocation2] sm:$0xff]
    %v24 = vld [vmem:[#allocation2 + $0x8] sm:$0xff]
    %v25 = vxor.u32 %v23, 2147483648
    %v26 = vxor.u32 %v24, 2147483648
    %v27 = vmul.f32 %v25, 1.442695
    %v28 = vpow.pop %v27
    %v29 = vmul.f32 %v26, 1.442695
    %v30 = vpow.pop %v29
    %v31 = vadd.f32 %v28, 1.0
    %v32 = vadd.f32 %v30, 1.0
    %v33 = vrcp.pop %v31
    %v34 = vmul.f32 1.0, %v33
    %v35 = vrcp.pop %v32
    %v36 = vmul.f32 1.0, %v35
    %v37 = vsub.f32 %v34, 0.5
    %v38 = vsub.f32 %v36, 0.5
    %39 = vst [vmem:[#allocation5] sm:$0xff] %v37
    %40 = vst [vmem:[#allocation5 + $0x8] sm:$0xff] %v38
    // Predicated region
    $region10: #{tpu_custom_call.1} parent=1 // pred_check
      _
    $region11: #{tpu_custom_call.1} parent=1 // pred_check_branch
      %42 = sbr.rel (0) target = $region13
    $region12: #{tpu_custom_call.1} parent=1 // pred_region
      %s44 = ssub.s32 256, 256
      %45 = vsyncadd [#allocation4], %s44
      %s46 = sshll.u32 [#allocation5], 4
      %s47 = int_to_ptr.vmem [resolvable:$true] %s46
      %52 = dma.vmem_to_hbm [thread:$0]  %s47, 256, %s1, [#allocation4], 128, 128, 8
    $region13: #{tpu_custom_call.1} parent=1 // pred_fallthru
      _
    // Predicated region
    $region14: #{tpu_custom_call.1} parent=1 // pred_check
      _
    $region15: #{tpu_custom_call.1} parent=1 // pred_check_branch
      %54 = sbr.rel (0) target = $region17
    $region16: #{tpu_custom_call.1} parent=1 // pred_region
      %55 = dma.done [#allocation4], 256
    $region17: #{tpu_custom_call.1} parent=1 // pred_fallthru
      _
    %56 = vsyncpa [#allocation3], 1
    %57 = vsyncpa [#allocation4], 1

</llo_original>
